<compile_context>
chip_gen: v5e
topology: v5e:2x2
jax: 0.10.0
libtpu: 0.0.40
codegen_flags: <defaults>
</compile_context>

<pallas_src>
import functools
import math

import jax
import jax.numpy as jnp
from jax.experimental import pallas as pl
from jax.experimental.pallas import tpu as pltpu

_LANE = 128


def _round_up(n, m):
    return ((n + m - 1) // m) * m


def _pad2(a, rows, cols):
    return jnp.pad(a, ((0, rows - a.shape[0]), (0, cols - a.shape[1])))


def _leaky_relu(h, slope=0.2):
    return jnp.where(h > 0, h, slope * h)


def vae_forward_kernel(
    # inputs
    x_ref, eps_ref, w_to_h_ref, w_from_h_ref, rows_h_ref, rows_io_ref,
    # outputs
    xrec_ref, zmu_ref, zlv_ref,
    # static dims (bound via functools.partial)
    *, in_p, hid_p, lat_p,
):
    f32 = jnp.float32
    bf16 = jnp.bfloat16

    # Static row offsets into the row-concatenated "-> hidden" weight slab
    # (all multiples of 128, so slices are tile-aligned).
    r_w1 = 0
    r_w2 = r_w1 + in_p
    r_wd1 = r_w2 + hid_p
    r_wd2 = r_wd1 + lat_p

    def row(i):
        # (1, hid_p) f32 bias / gamma / beta row, read at point of use.
        return rows_h_ref[i:i + 1, :]

    def matmul(h, w):
        # bf16 x bf16 MXU matmul, f32 accumulate.
        return jnp.dot(h.astype(bf16), w, preferred_element_type=f32)

    def bn_leaky(h, g, be):
        # PyTorch BatchNorm1d in training mode: biased batch variance,
        # eps=1e-5; folded to one multiply-add per element.  The one-pass
        # variance is clamped at 0 to guard against catastrophic cancellation.
        mean = jnp.mean(h, axis=0, keepdims=True)
        var = jnp.maximum(jnp.mean(h * h, axis=0, keepdims=True) - mean * mean, 0.0)
        scale = g * jax.lax.rsqrt(var + 1e-5)
        shift = be - mean * scale
        return _leaky_relu(h * scale + shift)

    # --- Encoder ---
    h = matmul(x_ref[...], w_to_h_ref[r_w1:r_w1 + in_p, :]) + row(0)       # b1
    h = bn_leaky(h, row(1), row(2))                                        # g1, be1
    h = matmul(h, w_to_h_ref[r_w2:r_w2 + hid_p, :]) + row(3)               # b2
    h = bn_leaky(h, row(4), row(5))                                        # g2, be2

    # Fused (mu | logvar) head: one MXU pass; split at lat_p is lane-aligned.
    h3 = matmul(h, w_from_h_ref[:, 0:2 * lat_p]) + rows_io_ref[0:1, 0:2 * lat_p]
    z_mu = h3[:, :lat_p]
    z_lv = h3[:, lat_p:]

    # --- Reparameterization trick (std = exp(logvar), as in the torch code) ---
    z = eps_ref[...] * jnp.exp(z_lv) + z_mu

    # --- Decoder ---
    d = _leaky_relu(matmul(z, w_to_h_ref[r_wd1:r_wd1 + lat_p, :]) + row(6))   # bd1
    d = _leaky_relu(matmul(d, w_to_h_ref[r_wd2:r_wd2 + hid_p, :]) + row(7))   # bd2
    x_rec = (matmul(d, w_from_h_ref[:, 2 * lat_p:2 * lat_p + in_p])
             + rows_io_ref[0:1, 2 * lat_p:2 * lat_p + in_p])

    xrec_ref[...] = x_rec.astype(xrec_ref.dtype)
    zmu_ref[...] = z_mu.astype(zmu_ref.dtype)
    zlv_ref[...] = z_lv.astype(zlv_ref.dtype)


def prepare_params(params, input_dim, hidden_dim, latent_dim,
                   matmul_dtype=jnp.bfloat16):
    """Pad / stack / cast the parameter pytree ONCE (hoisted out of the
    per-call hot path).  Returns a packed dict consumed by vae_forward."""
    in_p = _round_up(input_dim, _LANE)
    hid_p = _round_up(hidden_dim, _LANE)
    lat_p = _round_up(latent_dim, _LANE)
    # TODO(synk): if latent_dim << 128 while hidden_dim is large, pad the
    # latent axis only to a multiple of 8 and keep the mu/logvar matmuls split:
    # the 8x saving on w3/wd1 DMA bytes then outweighs two tiny masked stores.

    # Fused encoder head: mu columns land in [0, lat_p), logvar columns in
    # [lat_p, 2*lat_p), so the in-kernel split is lane-aligned.
    w3_mu, w3_lv = params["w3"][:, :latent_dim], params["w3"][:, latent_dim:]
    b3_mu, b3_lv = params["b3"][:, :latent_dim], params["b3"][:, latent_dim:]
    w3_p = jnp.concatenate([_pad2(w3_mu, hid_p, lat_p),
                            _pad2(w3_lv, hid_p, lat_p)], axis=1)
    b3_p = jnp.concatenate([_pad2(b3_mu, 1, lat_p),
                            _pad2(b3_lv, 1, lat_p)], axis=1)

    # All weights producing a hidden-width activation, row-concatenated.
    w_to_h = jnp.concatenate([
        _pad2(params["w1"], in_p, hid_p),
        _pad2(params["w2"], hid_p, hid_p),
        _pad2(params["wd1"], lat_p, hid_p),
        _pad2(params["wd2"], hid_p, hid_p),
    ], axis=0).astype(matmul_dtype)

    # Weights consuming a hidden-width activation, column-concatenated.
    w_from_h = jnp.concatenate([
        w3_p,
        _pad2(params["wd3"], hid_p, in_p),
    ], axis=1).astype(matmul_dtype)

    # Eight (1, hid_p) bias / gamma / beta rows -> one (8, hid_p) f32 array.
    rows_h = jnp.concatenate([
        _pad2(params["b1"], 1, hid_p), _pad2(params["g1"], 1, hid_p),
        _pad2(params["be1"], 1, hid_p),
        _pad2(params["b2"], 1, hid_p), _pad2(params["g2"], 1, hid_p),
        _pad2(params["be2"], 1, hid_p),
        _pad2(params["bd1"], 1, hid_p), _pad2(params["bd2"], 1, hid_p),
    ], axis=0).astype(jnp.float32)

    # b3 | bd3 packed into one lane-aligned row.
    rows_io = jnp.concatenate(
        [b3_p, _pad2(params["bd3"], 1, in_p)], axis=1).astype(jnp.float32)

    return dict(
        w_to_h=w_to_h, w_from_h=w_from_h, rows_h=rows_h, rows_io=rows_io,
        input_dim=input_dim, hidden_dim=hidden_dim, latent_dim=latent_dim,
        in_p=in_p, hid_p=hid_p, lat_p=lat_p,
    )


def _vmem_capacity_bytes():
    try:
        return int(pltpu.get_tpu_info().vmem_capacity_bytes)
    except Exception:
        return 64 << 20   # conservative fallback (v7x per-TensorCore VMEM)


def vae_forward(x, eps, packed):
    """x: (B, input_dim) f32; eps: (B, latent_dim) f32 (the randn draw);
    packed: output of prepare_params.  Returns (x_rec, z_mu, z_logvar)."""
    B = x.shape[0]
    in_p, hid_p, lat_p = packed["in_p"], packed["hid_p"], packed["lat_p"]

    # Per-call work: only pad x / eps up to lane multiples.  Batch rows are
    # NOT padded — BatchNorm statistics must see exactly B rows.
    x_p = _pad2(x.astype(jnp.float32), B, in_p)
    eps_p = _pad2(eps.astype(jnp.float32), B, lat_p)

    inputs = (x_p, eps_p, packed["w_to_h"], packed["w_from_h"],
              packed["rows_h"], packed["rows_io"])

    out_shape = (
        jax.ShapeDtypeStruct((B, in_p), jnp.float32),   # x_rec (lane padded)
        jax.ShapeDtypeStruct((B, lat_p), jnp.float32),  # z_mu
        jax.ShapeDtypeStruct((B, lat_p), jnp.float32),  # z_logvar
    )

    # VMEM budget: everything resident once (no grid => no double buffering)
    # plus activation/scratch headroom, capped at ~85% of this generation's
    # per-core VMEM (headroom for Mosaic internal scratch / semaphores).
    resident = sum(a.size * a.dtype.itemsize for a in inputs)
    resident += sum(math.prod(s.shape) * s.dtype.itemsize for s in out_shape)
    act_bytes = 12 * B * max(in_p, hid_p, 2 * lat_p) * 4
    cap = int(0.85 * _vmem_capacity_bytes())
    vmem_limit = int(min(max(resident + act_bytes + (2 << 20), 4 << 20), cap))

    vmem = pltpu.MemorySpace.VMEM
    kernel = functools.partial(vae_forward_kernel,
                               in_p=in_p, hid_p=hid_p, lat_p=lat_p)

    xrec_p, zmu_p, zlv_p = pl.pallas_call(
        kernel,
        out_shape=out_shape,
        in_specs=[pl.BlockSpec(memory_space=vmem) for _ in inputs],
        out_specs=tuple(pl.BlockSpec(memory_space=vmem) for _ in out_shape),
        compiler_params=pltpu.CompilerParams(vmem_limit_bytes=vmem_limit),
    )(*inputs)

    # TODO(synk): for batches whose activations exceed one core's VMEM (and to
    # feed both v7x TensorCores), restructure into a batch-tiled grid with
    # dimension_semantics=("parallel",), weights pinned via constant
    # index_maps, a two-pass BatchNorm, and batch tiles >= 128 rows.
    in_dim, lat_dim = packed["input_dim"], packed["latent_dim"]
    return xrec_p[:, :in_dim], zmu_p[:, :lat_dim], zlv_p[:, :lat_dim]


def init_params(key, input_dim, hidden_dim, latent_dim):
    """Deterministic synthetic init (shapes match the PyTorch module __init__,
    linear weights stored as (in, out))."""
    ks = jax.random.split(key, 12)

    def lin_init(kw, kb, fan_in, fan_out):
        bound = 1.0 / jnp.sqrt(fan_in)
        w = jax.random.uniform(kw, (fan_in, fan_out), jnp.float32, -bound, bound)
        b = jax.random.uniform(kb, (1, fan_out), jnp.float32, -bound, bound)
        return w, b

    p = {}
    # Encoder
    p["w1"], p["b1"] = lin_init(ks[0], ks[1], input_dim, hidden_dim)
    p["g1"] = jnp.ones((1, hidden_dim), jnp.float32)     # BatchNorm1d weight
    p["be1"] = jnp.zeros((1, hidden_dim), jnp.float32)   # BatchNorm1d bias
    p["w2"], p["b2"] = lin_init(ks[2], ks[3], hidden_dim, hidden_dim)
    p["g2"] = jnp.ones((1, hidden_dim), jnp.float32)
    p["be2"] = jnp.zeros((1, hidden_dim), jnp.float32)
    p["w3"], p["b3"] = lin_init(ks[4], ks[5], hidden_dim, 2 * latent_dim)
    # Decoder
    p["wd1"], p["bd1"] = lin_init(ks[6], ks[7], latent_dim, hidden_dim)
    p["wd2"], p["bd2"] = lin_init(ks[8], ks[9], hidden_dim, hidden_dim)
    p["wd3"], p["bd3"] = lin_init(ks[10], ks[11], hidden_dim, input_dim)
    return p


def vae_forward_ref(x, eps, p, matmul_dtype=None):
    """Pure-JAX reference mirroring the PyTorch module in train mode.
    If matmul_dtype is given, matmul inputs are cast the same way the kernel
    casts them (f32 accumulation, f32 biases / BN / elementwise)."""
    def lin(h, w, b):
        if matmul_dtype is not None:
            h = h.astype(matmul_dtype)
            w = w.astype(matmul_dtype)
        return jnp.dot(h, w, preferred_element_type=jnp.float32) + b

    def bn(h, g, be):
        m = jnp.mean(h, axis=0, keepdims=True)
        v = jnp.mean((h - m) ** 2, axis=0, keepdims=True)
        return g * (h - m) / jnp.sqrt(v + 1e-5) + be

    h = _leaky_relu(bn(lin(x, p["w1"], p["b1"]), p["g1"], p["be1"]))
    h = _leaky_relu(bn(lin(h, p["w2"], p["b2"]), p["g2"], p["be2"]))
    h = lin(h, p["w3"], p["b3"])
    L = eps.shape[1]
    z_mu, z_lv = h[:, :L], h[:, L:]
    z = eps * jnp.exp(z_lv) + z_mu
    d = _leaky_relu(lin(z, p["wd1"], p["bd1"]))
    d = _leaky_relu(lin(d, p["wd2"], p["bd2"]))
    return lin(d, p["wd3"], p["bd3"]), z_mu, z_lv


if __name__ == "__main__":
    B, INPUT_DIM, HIDDEN_DIM, LATENT_DIM = 8, 32, 64, 16

    key = jax.random.PRNGKey(0)
    k_x, k_eps, k_params = jax.random.split(key, 3)

    x = jax.random.normal(k_x, (B, INPUT_DIM), jnp.float32)
    eps = jax.random.normal(k_eps, (B, LATENT_DIM), jnp.float32)  # randn_like(z_mu)
    params = init_params(k_params, INPUT_DIM, HIDDEN_DIM, LATENT_DIM)

    # Parameter padding / packing / bf16 cast done once, outside the hot path.
    packed = prepare_params(params, INPUT_DIM, HIDDEN_DIM, LATENT_DIM)

    x_rec, z_mu, z_logvar = vae_forward(x, eps, packed)
    jax.block_until_ready((x_rec, z_mu, z_logvar))

    assert x_rec.shape == (B, INPUT_DIM)
    assert z_mu.shape == (B, LATENT_DIM) and z_logvar.shape == (B, LATENT_DIM)

    # Tight check vs a JAX reference using the same bf16 matmul inputs
    # (validates kernel structure / packing / layout exactly).
    xr_b, zm_b, zl_b = vae_forward_ref(x, eps, params, matmul_dtype=jnp.bfloat16)
    assert jnp.allclose(x_rec, xr_b, atol=1e-3, rtol=1e-3)
    assert jnp.allclose(z_mu, zm_b, atol=1e-3, rtol=1e-3)
    assert jnp.allclose(z_logvar, zl_b, atol=1e-3, rtol=1e-3)

    # Loose check vs the pure-f32 reference (PyTorch-equivalent semantics);
    # the extra slack is only the bf16 weight/activation rounding.
    xr_f, zm_f, zl_f = vae_forward_ref(x, eps, params)
    assert jnp.allclose(x_rec, xr_f, atol=5e-2, rtol=5e-2)
    assert jnp.allclose(z_mu, zm_f, atol=5e-2, rtol=5e-2)
    assert jnp.allclose(z_logvar, zl_f, atol=5e-2, rtol=5e-2)

    print("KERNEL_OK")
</pallas_src>

<mosaic_0001>
module attributes {stable_mosaic.version = 11 : i64} {
  func.func @vae_forward_kernel(%arg0: memref<8x128xf32, #tpu.memory_space<vmem>>, %arg1: memref<8x128xf32, #tpu.memory_space<vmem>>, %arg2: memref<512x128xbf16, #tpu.memory_space<vmem>>, %arg3: memref<128x384xbf16, #tpu.memory_space<vmem>>, %arg4: memref<8x128xf32, #tpu.memory_space<vmem>>, %arg5: memref<1x384xf32, #tpu.memory_space<vmem>>, %arg6: memref<8x128xf32, #tpu.memory_space<vmem>>, %arg7: memref<8x128xf32, #tpu.memory_space<vmem>>, %arg8: memref<8x128xf32, #tpu.memory_space<vmem>>) attributes {dimension_semantics = [], scalar_prefetch = 0 : i64, scratch_operands = 0 : i64, tpu.core_type = #tpu.core_type<tc>} {
    %c0 = arith.constant 0 : index
    %c0_0 = arith.constant 0 : index
    %0 = vector.load %arg0[%c0, %c0_0] : memref<8x128xf32, #tpu.memory_space<vmem>>, vector<8x128xf32>
    %c0_1 = arith.constant 0 : index
    %c0_2 = arith.constant 0 : index
    %1 = vector.load %arg2[%c0_1, %c0_2] : memref<512x128xbf16, #tpu.memory_space<vmem>>, vector<128x128xbf16>
    %2 = arith.truncf %0 : vector<8x128xf32> to vector<8x128xbf16>
    %cst = arith.constant dense<0.000000e+00> : vector<8x128xf32>
    %3 = tpu.matmul %2, %1, %cst {dimension_numbers = #tpu.dot_dimension_numbers<[1], [0], [0], [1], [0, 0, 1, 1], [], []>} : vector<8x128xbf16>, vector<128x128xbf16>, vector<8x128xf32> -> vector<8x128xf32>
    %c0_3 = arith.constant 0 : index
    %c0_4 = arith.constant 0 : index
    %4 = vector.load %arg4[%c0_3, %c0_4] : memref<8x128xf32, #tpu.memory_space<vmem>>, vector<1x128xf32>
    %5 = vector.broadcast %4 : vector<1x128xf32> to vector<8x128xf32>
    %6 = arith.addf %3, %5 : vector<8x128xf32>
    %c1 = arith.constant 1 : index
    %c0_5 = arith.constant 0 : index
    %7 = vector.load %arg4[%c1, %c0_5] : memref<8x128xf32, #tpu.memory_space<vmem>>, vector<1x128xf32>
    %c2 = arith.constant 2 : index
    %c0_6 = arith.constant 0 : index
    %8 = vector.load %arg4[%c2, %c0_6] : memref<8x128xf32, #tpu.memory_space<vmem>>, vector<1x128xf32>
    %cst_7 = arith.constant dense<0.000000e+00> : vector<128xf32>
    %9 = vector.multi_reduction <add>, %6, %cst_7 [0] : vector<8x128xf32> to vector<128xf32>
    %10 = vector.shape_cast %9 : vector<128xf32> to vector<1x128xf32>
    %cst_8 = arith.constant 8.000000e+00 : f32
    %11 = vector.broadcast %cst_8 : f32 to vector<1x128xf32>
    %12 = arith.divf %10, %11 : vector<1x128xf32>
    %13 = arith.mulf %6, %6 : vector<8x128xf32>
    %cst_9 = arith.constant dense<0.000000e+00> : vector<128xf32>
    %14 = vector.multi_reduction <add>, %13, %cst_9 [0] : vector<8x128xf32> to vector<128xf32>
    %15 = vector.shape_cast %14 : vector<128xf32> to vector<1x128xf32>
    %cst_10 = arith.constant 8.000000e+00 : f32
    %16 = vector.broadcast %cst_10 : f32 to vector<1x128xf32>
    %17 = arith.divf %15, %16 : vector<1x128xf32>
    %18 = arith.mulf %12, %12 : vector<1x128xf32>
    %19 = arith.subf %17, %18 : vector<1x128xf32>
    %cst_11 = arith.constant 0.000000e+00 : f32
    %20 = vector.broadcast %cst_11 : f32 to vector<1x128xf32>
    %21 = arith.maximumf %19, %20 : vector<1x128xf32>
    %cst_12 = arith.constant 9.99999974E-6 : f32
    %22 = vector.broadcast %cst_12 : f32 to vector<1x128xf32>
    %23 = arith.addf %21, %22 : vector<1x128xf32>
    %24 = math.rsqrt %23 : vector<1x128xf32>
    %25 = arith.mulf %7, %24 : vector<1x128xf32>
    %26 = arith.mulf %12, %25 : vector<1x128xf32>
    %27 = arith.subf %8, %26 : vector<1x128xf32>
    %28 = vector.broadcast %25 : vector<1x128xf32> to vector<8x128xf32>
    %29 = arith.mulf %6, %28 : vector<8x128xf32>
    %30 = vector.broadcast %27 : vector<1x128xf32> to vector<8x128xf32>
    %31 = arith.addf %29, %30 : vector<8x128xf32>
    %cst_13 = arith.constant 0.000000e+00 : f32
    %32 = vector.broadcast %cst_13 : f32 to vector<8x128xf32>
    %33 = arith.cmpf ogt, %31, %32 : vector<8x128xf32>
    %cst_14 = arith.constant 2.000000e-01 : f32
    %34 = vector.broadcast %cst_14 : f32 to vector<8x128xf32>
    %35 = arith.mulf %34, %31 : vector<8x128xf32>
    %36 = arith.select %33, %31, %35 : vector<8x128xi1>, vector<8x128xf32>
    %c128 = arith.constant 128 : index
    %c0_15 = arith.constant 0 : index
    %37 = vector.load %arg2[%c128, %c0_15] : memref<512x128xbf16, #tpu.memory_space<vmem>>, vector<128x128xbf16>
    %38 = arith.truncf %36 : vector<8x128xf32> to vector<8x128xbf16>
    %cst_16 = arith.constant dense<0.000000e+00> : vector<8x128xf32>
    %39 = tpu.matmul %38, %37, %cst_16 {dimension_numbers = #tpu.dot_dimension_numbers<[1], [0], [0], [1], [0, 0, 1, 1], [], []>} : vector<8x128xbf16>, vector<128x128xbf16>, vector<8x128xf32> -> vector<8x128xf32>
    %c3 = arith.constant 3 : index
    %c0_17 = arith.constant 0 : index
    %40 = vector.load %arg4[%c3, %c0_17] : memref<8x128xf32, #tpu.memory_space<vmem>>, vector<1x128xf32>
    %41 = vector.broadcast %40 : vector<1x128xf32> to vector<8x128xf32>
    %42 = arith.addf %39, %41 : vector<8x128xf32>
    %c4 = arith.constant 4 : index
    %c0_18 = arith.constant 0 : index
    %43 = vector.load %arg4[%c4, %c0_18] : memref<8x128xf32, #tpu.memory_space<vmem>>, vector<1x128xf32>
    %c5 = arith.constant 5 : index
    %c0_19 = arith.constant 0 : index
    %44 = vector.load %arg4[%c5, %c0_19] : memref<8x128xf32, #tpu.memory_space<vmem>>, vector<1x128xf32>
    %cst_20 = arith.constant dense<0.000000e+00> : vector<128xf32>
    %45 = vector.multi_reduction <add>, %42, %cst_20 [0] : vector<8x128xf32> to vector<128xf32>
    %46 = vector.shape_cast %45 : vector<128xf32> to vector<1x128xf32>
    %cst_21 = arith.constant 8.000000e+00 : f32
    %47 = vector.broadcast %cst_21 : f32 to vector<1x128xf32>
    %48 = arith.divf %46, %47 : vector<1x128xf32>
    %49 = arith.mulf %42, %42 : vector<8x128xf32>
    %cst_22 = arith.constant dense<0.000000e+00> : vector<128xf32>
    %50 = vector.multi_reduction <add>, %49, %cst_22 [0] : vector<8x128xf32> to vector<128xf32>
    %51 = vector.shape_cast %50 : vector<128xf32> to vector<1x128xf32>
    %cst_23 = arith.constant 8.000000e+00 : f32
    %52 = vector.broadcast %cst_23 : f32 to vector<1x128xf32>
    %53 = arith.divf %51, %52 : vector<1x128xf32>
    %54 = arith.mulf %48, %48 : vector<1x128xf32>
    %55 = arith.subf %53, %54 : vector<1x128xf32>
    %cst_24 = arith.constant 0.000000e+00 : f32
    %56 = vector.broadcast %cst_24 : f32 to vector<1x128xf32>
    %57 = arith.maximumf %55, %56 : vector<1x128xf32>
    %cst_25 = arith.constant 9.99999974E-6 : f32
    %58 = vector.broadcast %cst_25 : f32 to vector<1x128xf32>
    %59 = arith.addf %57, %58 : vector<1x128xf32>
    %60 = math.rsqrt %59 : vector<1x128xf32>
    %61 = arith.mulf %43, %60 : vector<1x128xf32>
    %62 = arith.mulf %48, %61 : vector<1x128xf32>
    %63 = arith.subf %44, %62 : vector<1x128xf32>
    %64 = vector.broadcast %61 : vector<1x128xf32> to vector<8x128xf32>
    %65 = arith.mulf %42, %64 : vector<8x128xf32>
    %66 = vector.broadcast %63 : vector<1x128xf32> to vector<8x128xf32>
    %67 = arith.addf %65, %66 : vector<8x128xf32>
    %cst_26 = arith.constant 0.000000e+00 : f32
    %68 = vector.broadcast %cst_26 : f32 to vector<8x128xf32>
    %69 = arith.cmpf ogt, %67, %68 : vector<8x128xf32>
    %cst_27 = arith.constant 2.000000e-01 : f32
    %70 = vector.broadcast %cst_27 : f32 to vector<8x128xf32>
    %71 = arith.mulf %70, %67 : vector<8x128xf32>
    %72 = arith.select %69, %67, %71 : vector<8x128xi1>, vector<8x128xf32>
    %c0_28 = arith.constant 0 : index
    %c0_29 = arith.constant 0 : index
    %73 = vector.load %arg3[%c0_28, %c0_29] : memref<128x384xbf16, #tpu.memory_space<vmem>>, vector<128x256xbf16>
    %74 = arith.truncf %72 : vector<8x128xf32> to vector<8x128xbf16>
    %cst_30 = arith.constant dense<0.000000e+00> : vector<8x256xf32>
    %75 = tpu.matmul %74, %73, %cst_30 {dimension_numbers = #tpu.dot_dimension_numbers<[1], [0], [0], [1], [0, 0, 1, 1], [], []>} : vector<8x128xbf16>, vector<128x256xbf16>, vector<8x256xf32> -> vector<8x256xf32>
    %c0_31 = arith.constant 0 : index
    %c0_32 = arith.constant 0 : index
    %76 = vector.load %arg5[%c0_31, %c0_32] : memref<1x384xf32, #tpu.memory_space<vmem>>, vector<1x256xf32>
    %77 = vector.broadcast %76 : vector<1x256xf32> to vector<8x256xf32>
    %78 = arith.addf %75, %77 : vector<8x256xf32>
    %79 = vector.extract_strided_slice %78 {offsets = [0, 0], sizes = [8, 128], strides = [1, 1]} : vector<8x256xf32> to vector<8x128xf32>
    %80 = vector.extract_strided_slice %78 {offsets = [0, 128], sizes = [8, 128], strides = [1, 1]} : vector<8x256xf32> to vector<8x128xf32>
    %c0_33 = arith.constant 0 : index
    %c0_34 = arith.constant 0 : index
    %81 = vector.load %arg1[%c0_33, %c0_34] : memref<8x128xf32, #tpu.memory_space<vmem>>, vector<8x128xf32>
    %82 = math.exp %80 : vector<8x128xf32>
    %83 = arith.mulf %81, %82 : vector<8x128xf32>
    %84 = arith.addf %83, %79 : vector<8x128xf32>
    %c256 = arith.constant 256 : index
    %c0_35 = arith.constant 0 : index
    %85 = vector.load %arg2[%c256, %c0_35] : memref<512x128xbf16, #tpu.memory_space<vmem>>, vector<128x128xbf16>
    %86 = arith.truncf %84 : vector<8x128xf32> to vector<8x128xbf16>
    %cst_36 = arith.constant dense<0.000000e+00> : vector<8x128xf32>
    %87 = tpu.matmul %86, %85, %cst_36 {dimension_numbers = #tpu.dot_dimension_numbers<[1], [0], [0], [1], [0, 0, 1, 1], [], []>} : vector<8x128xbf16>, vector<128x128xbf16>, vector<8x128xf32> -> vector<8x128xf32>
    %c6 = arith.constant 6 : index
    %c0_37 = arith.constant 0 : index
    %88 = vector.load %arg4[%c6, %c0_37] : memref<8x128xf32, #tpu.memory_space<vmem>>, vector<1x128xf32>
    %89 = vector.broadcast %88 : vector<1x128xf32> to vector<8x128xf32>
    %90 = arith.addf %87, %89 : vector<8x128xf32>
    %cst_38 = arith.constant 0.000000e+00 : f32
    %91 = vector.broadcast %cst_38 : f32 to vector<8x128xf32>
    %92 = arith.cmpf ogt, %90, %91 : vector<8x128xf32>
    %cst_39 = arith.constant 2.000000e-01 : f32
    %93 = vector.broadcast %cst_39 : f32 to vector<8x128xf32>
    %94 = arith.mulf %93, %90 : vector<8x128xf32>
    %95 = arith.select %92, %90, %94 : vector<8x128xi1>, vector<8x128xf32>
    %c384 = arith.constant 384 : index
    %c0_40 = arith.constant 0 : index
    %96 = vector.load %arg2[%c384, %c0_40] : memref<512x128xbf16, #tpu.memory_space<vmem>>, vector<128x128xbf16>
    %97 = arith.truncf %95 : vector<8x128xf32> to vector<8x128xbf16>
    %cst_41 = arith.constant dense<0.000000e+00> : vector<8x128xf32>
    %98 = tpu.matmul %97, %96, %cst_41 {dimension_numbers = #tpu.dot_dimension_numbers<[1], [0], [0], [1], [0, 0, 1, 1], [], []>} : vector<8x128xbf16>, vector<128x128xbf16>, vector<8x128xf32> -> vector<8x128xf32>
    %c7 = arith.constant 7 : index
    %c0_42 = arith.constant 0 : index
    %99 = vector.load %arg4[%c7, %c0_42] : memref<8x128xf32, #tpu.memory_space<vmem>>, vector<1x128xf32>
    %100 = vector.broadcast %99 : vector<1x128xf32> to vector<8x128xf32>
    %101 = arith.addf %98, %100 : vector<8x128xf32>
    %cst_43 = arith.constant 0.000000e+00 : f32
    %102 = vector.broadcast %cst_43 : f32 to vector<8x128xf32>
    %103 = arith.cmpf ogt, %101, %102 : vector<8x128xf32>
    %cst_44 = arith.constant 2.000000e-01 : f32
    %104 = vector.broadcast %cst_44 : f32 to vector<8x128xf32>
    %105 = arith.mulf %104, %101 : vector<8x128xf32>
    %106 = arith.select %103, %101, %105 : vector<8x128xi1>, vector<8x128xf32>
    %c0_45 = arith.constant 0 : index
    %c256_46 = arith.constant 256 : index
    %107 = vector.load %arg3[%c0_45, %c256_46] : memref<128x384xbf16, #tpu.memory_space<vmem>>, vector<128x128xbf16>
    %108 = arith.truncf %106 : vector<8x128xf32> to vector<8x128xbf16>
    %cst_47 = arith.constant dense<0.000000e+00> : vector<8x128xf32>
    %109 = tpu.matmul %108, %107, %cst_47 {dimension_numbers = #tpu.dot_dimension_numbers<[1], [0], [0], [1], [0, 0, 1, 1], [], []>} : vector<8x128xbf16>, vector<128x128xbf16>, vector<8x128xf32> -> vector<8x128xf32>
    %c0_48 = arith.constant 0 : index
    %c256_49 = arith.constant 256 : index
    %110 = vector.load %arg5[%c0_48, %c256_49] : memref<1x384xf32, #tpu.memory_space<vmem>>, vector<1x128xf32>
    %111 = vector.broadcast %110 : vector<1x128xf32> to vector<8x128xf32>
    %112 = arith.addf %109, %111 : vector<8x128xf32>
    %c0_50 = arith.constant 0 : index
    %c0_51 = arith.constant 0 : index
    %113 = vector.load %arg6[%c0_50, %c0_51] : memref<8x128xf32, #tpu.memory_space<vmem>>, vector<8x128xf32>
    tpu.vector_store %arg6[%c0_50, %c0_51], %112 {strides = array<i32>} : memref<8x128xf32, #tpu.memory_space<vmem>>, vector<8x128xf32>,
    %c0_52 = arith.constant 0 : index
    %c0_53 = arith.constant 0 : index
    %114 = vector.load %arg7[%c0_52, %c0_53] : memref<8x128xf32, #tpu.memory_space<vmem>>, vector<8x128xf32>
    tpu.vector_store %arg7[%c0_52, %c0_53], %79 {strides = array<i32>} : memref<8x128xf32, #tpu.memory_space<vmem>>, vector<8x128xf32>,
    %c0_54 = arith.constant 0 : index
    %c0_55 = arith.constant 0 : index
    %115 = vector.load %arg8[%c0_54, %c0_55] : memref<8x128xf32, #tpu.memory_space<vmem>>, vector<8x128xf32>
    tpu.vector_store %arg8[%c0_54, %c0_55], %80 {strides = array<i32>} : memref<8x128xf32, #tpu.memory_space<vmem>>, vector<8x128xf32>,
    return
  }
}

</mosaic_0001>

<llo_original>
// kernel: tpu_custom_call.1
$region0: #{tpu_custom_call.1}
  #allocation0 [shape = 'u32[]', space=smem, size = 0x4, offset = 0x4, fixed_abs, tag = 'smem constant byte address 0x4 - core index']
  #allocation1 [shape = 'u32[72,128]{1,0:T(1,128)}', space=vmem, size = 0x9000, scoped, tag = 'internal scratch']
  %s0 = inlined_call_operand.hbm [shape: f32[8,128], index: 0, kind: input, shape index: {}]
  %s1 = inlined_call_operand.hbm [shape: f32[8,128], index: 1, kind: input, shape index: {}]
  %s2 = inlined_call_operand.hbm [shape: bf16[512,128], index: 2, kind: input, shape index: {}]
  %s3 = inlined_call_operand.hbm [shape: bf16[128,384], index: 3, kind: input, shape index: {}]
  %s4 = inlined_call_operand.hbm [shape: f32[8,128], index: 4, kind: input, shape index: {}]
  %s5 = inlined_call_operand.vmem [shape: f32[1,384], index: 5, kind: input, shape index: {}]
  %s6 = inlined_call_operand.hbm [shape: f32[8,128], index: 6, kind: output, shape index: {0}]
  %s7 = inlined_call_operand.hbm [shape: f32[8,128], index: 7, kind: output, shape index: {1}]
  %s8 = inlined_call_operand.hbm [shape: f32[8,128], index: 8, kind: output, shape index: {2}]
  %9 = xla_tuple %s6, %s7, %s8
  %s10 = sld [smem:[#allocation0]]
  $region70: #{tpu_custom_call.1} parent=0
    _
  %s12 = ssub.s32 1, %s10
  %s13 = scalar_select 0, %s12, %s10
  $region1: #{tpu_custom_call.1} parent=0
    #allocation2 [shape = 'u8[4096]{0}', space=vmem, size = 0x1000, scoped, tag = 'input window, operand 0, single buffered']
    #allocation3 [shape = 's32[1]{0}', space=sflag, size = 0x4, scoped, tag = 'scoped memory for tpu_custom_call.1']
    #allocation4 [shape = 's32[1]{0}', space=sflag, size = 0x4, scoped, tag = 'scoped memory for tpu_custom_call.1']
    #allocation5 [shape = 'u8[4096]{0}', space=vmem, size = 0x1000, scoped, tag = 'input window, operand 1, single buffered']
    #allocation6 [shape = 's32[1]{0}', space=sflag, size = 0x4, scoped, tag = 'scoped memory for tpu_custom_call.1']
    #allocation7 [shape = 'u8[131072]{0}', space=vmem, size = 0x20000, scoped, tag = 'input window, operand 2, single buffered']
    #allocation8 [shape = 'u8[98304]{0}', space=vmem, size = 0x18000, scoped, tag = 'input window, operand 3, single buffered']
    #allocation9 [shape = 's32[1]{0}', space=sflag, size = 0x4, scoped, tag = 'scoped memory for tpu_custom_call.1']
    #allocation10 [shape = 'u8[4096]{0}', space=vmem, size = 0x1000, scoped, tag = 'input window, operand 4, single buffered']
    #allocation11 [shape = 'u8[4096]{0}', space=vmem, size = 0x1000, scoped, tag = 'output window, operand 0, single buffered']
    #allocation12 [shape = 'u8[4096]{0}', space=vmem, size = 0x1000, scoped, tag = 'output window, operand 1, single buffered']
    #allocation13 [shape = 's32[1]{0}', space=sflag, size = 0x4, scoped, tag = 'scoped memory for tpu_custom_call.1']
    #allocation14 [shape = 'u8[4096]{0}', space=vmem, size = 0x1000, scoped, tag = 'output window, operand 2, single buffered']
    %14 = vsyncpa [#allocation3], 0
    %15 = vsyncpa [#allocation6], 0
    %16 = vsyncpa [#allocation9], 0
    %17 = vsyncpa [#allocation4], 0
    %18 = vsyncpa [#allocation13], 0
    // Predicated region
    $region2: #{tpu_custom_call.1} parent=1 // pred_check
      _
    $region3: #{tpu_custom_call.1} parent=1 // pred_check_branch
      %20 = sbr.rel (0) target = $region5
    $region4: #{tpu_custom_call.1} parent=1 // pred_region
      %22 = vsyncadd [#allocation3], 0
      %s24 = sshll.u32 %s0, 4
      %s25 = int_to_ptr.hbm [resolvable:$true] %s24
      %s26 = sshll.u32 [#allocation2], 4
      %s27 = int_to_ptr.vmem [resolvable:$true] %s26
      %29 = dma.hbm_to_vmem [thread:$0]  %s25, 128, %s27, [#allocation3]
    $region5: #{tpu_custom_call.1} parent=1 // pred_fallthru
      _
    // Predicated region
    $region6: #{tpu_custom_call.1} parent=1 // pred_check
      _
    $region7: #{tpu_custom_call.1} parent=1 // pred_check_branch
      %31 = sbr.rel (0) target = $region9
    $region8: #{tpu_custom_call.1} parent=1 // pred_region
      %33 = vsyncadd [#allocation6], 0
      %s35 = sshll.u32 %s1, 4
      %s36 = int_to_ptr.hbm [resolvable:$true] %s35
      %s37 = sshll.u32 [#allocation5], 4
      %s38 = int_to_ptr.vmem [resolvable:$true] %s37
      %40 = dma.hbm_to_vmem [thread:$0]  %s36, 128, %s38, [#allocation6]
    $region9: #{tpu_custom_call.1} parent=1 // pred_fallthru
      _
    // Predicated region
    $region10: #{tpu_custom_call.1} parent=1 // pred_check
      _
    $region11: #{tpu_custom_call.1} parent=1 // pred_check_branch
      %42 = sbr.rel (0) target = $region13
    $region12: #{tpu_custom_call.1} parent=1 // pred_region
      %44 = vsyncadd [#allocation6], 0
      %s45 = sshll.u32 %s2, 4
      %s46 = int_to_ptr.hbm [resolvable:$true] %s45
      %s47 = sshll.u32 [#allocation7], 4
      %s48 = int_to_ptr.vmem [resolvable:$true] %s47
      %53 = dma.hbm_to_vmem [thread:$0]  %s46, 4096, %s48, [#allocation6], 64, 64, 4
    $region13: #{tpu_custom_call.1} parent=1 // pred_fallthru
      _
    // Predicated region
    $region14: #{tpu_custom_call.1} parent=1 // pred_check
      _
    $region15: #{tpu_custom_call.1} parent=1 // pred_check_branch
      %55 = sbr.rel (0) target = $region17
    $region16: #{tpu_custom_call.1} parent=1 // pred_region
      %57 = vsyncadd [#allocation9], 0
      %s58 = sshll.u32 %s3, 4
      %s59 = int_to_ptr.hbm [resolvable:$true] %s58
      %s60 = sshll.u32 [#allocation8], 4
      %s61 = int_to_ptr.vmem [resolvable:$true] %s60
      %66 = dma.hbm_to_vmem [thread:$0]  %s59, 3072, %s61, [#allocation9], 192, 192, 12
    $region17: #{tpu_custom_call.1} parent=1 // pred_fallthru
      _
    // Predicated region
    $region18: #{tpu_custom_call.1} parent=1 // pred_check
      _
    $region19: #{tpu_custom_call.1} parent=1 // pred_check_branch
      %68 = sbr.rel (0) target = $region21
    $region20: #{tpu_custom_call.1} parent=1 // pred_region
      %70 = vsyncadd [#allocation9], 0
      %s72 = sshll.u32 %s4, 4
      %s73 = int_to_ptr.hbm [resolvable:$true] %s72
      %s74 = sshll.u32 [#allocation10], 4
      %s75 = int_to_ptr.vmem [resolvable:$true] %s74
      %77 = dma.hbm_to_vmem [thread:$0]  %s73, 128, %s75, [#allocation9]
    $region21: #{tpu_custom_call.1} parent=1 // pred_fallthru
      _
    // Predicated region
    $region22: #{tpu_custom_call.1} parent=1 // pred_check
      _
    $region23: #{tpu_custom_call.1} parent=1 // pred_check_branch
      %79 = sbr.rel (0) target = $region25
    $region24: #{tpu_custom_call.1} parent=1 // pred_region
      _
    $region25: #{tpu_custom_call.1} parent=1 // pred_fallthru
      _
    // Predicated region
    $region26: #{tpu_custom_call.1} parent=1 // pred_check
      _
    $region27: #{tpu_custom_call.1} parent=1 // pred_check_branch
      %81 = sbr.rel (0) target = $region29
    $region28: #{tpu_custom_call.1} parent=1 // pred_region
      %83 = dma.done [#allocation3], 128
    $region29: #{tpu_custom_call.1} parent=1 // pred_fallthru
      _
    // Predicated region
    $region30: #{tpu_custom_call.1} parent=1 // pred_check
      _
    $region31: #{tpu_custom_call.1} parent=1 // pred_check_branch
      %85 = sbr.rel (0) target = $region33
    $region32: #{tpu_custom_call.1} parent=1 // pred_region
      %87 = dma.done [#allocation6], 128
    $region33: #{tpu_custom_call.1} parent=1 // pred_fallthru
      _
    // Predicated region
    $region34: #{tpu_custom_call.1} parent=1 // pred_check
      _
    $region35: #{tpu_custom_call.1} parent=1 // pred_check_branch
      %89 = sbr.rel (0) target = $region37
    $region36: #{tpu_custom_call.1} parent=1 // pred_region
      %91 = dma.done [#allocation6], 4096
    $region37: #{tpu_custom_call.1} parent=1 // pred_fallthru
      _
    // Predicated region
    $region38: #{tpu_custom_call.1} parent=1 // pred_check
      _
    $region39: #{tpu_custom_call.1} parent=1 // pred_check_branch
      %93 = sbr.rel (0) target = $region41
    $region40: #{tpu_custom_call.1} parent=1 // pred_region
      %95 = dma.done [#allocation9], 3072
    $region41: #{tpu_custom_call.1} parent=1 // pred_fallthru
      _
    // Predicated region
    $region42: #{tpu_custom_call.1} parent=1 // pred_check
      _
    $region43: #{tpu_custom_call.1} parent=1 // pred_check_branch
      %97 = sbr.rel (0) target = $region45
    $region44: #{tpu_custom_call.1} parent=1 // pred_region
      %99 = dma.done [#allocation9], 128
    $region45: #{tpu_custom_call.1} parent=1 // pred_fallthru
      _
    %v100 = vld [vmem:[#allocation2] sm:$0xff]
    %v101 = vld [vmem:[#allocation7] sm:$0xf]
    %v102 = vld [vmem:[#allocation7 + $0x4] sm:$0xf]
    %v103 = vld [vmem:[#allocation7 + $0x8] sm:$0xf]
    %v104 = vld [vmem:[#allocation7 + $0xc] sm:$0xf]
    %v105 = vld [vmem:[#allocation7 + $0x10] sm:$0xf]
    %v106 = vld [vmem:[#allocation7 + $0x14] sm:$0xf]
    %v107 = vld [vmem:[#allocation7 + $0x18] sm:$0xf]
    %v108 = vld [vmem:[#allocation7 + $0x1c] sm:$0xf]
    %v109 = vld [vmem:[#allocation7 + $0x20] sm:$0xf]
    %v110 = vld [vmem:[#allocation7 + $0x24] sm:$0xf]
    %v111 = vld [vmem:[#allocation7 + $0x28] sm:$0xf]
    %v112 = vld [vmem:[#allocation7 + $0x2c] sm:$0xf]
    %v113 = vld [vmem:[#allocation7 + $0x30] sm:$0xf]
    %v114 = vld [vmem:[#allocation7 + $0x34] sm:$0xf]
    %v115 = vld [vmem:[#allocation7 + $0x38] sm:$0xf]
    %v116 = vld [vmem:[#allocation7 + $0x3c] sm:$0xf]
    %v117 = vpack.c.bf16 %v100, %v100
    %v118 = vld [vmem:[#allocation10] sm:$0x1]
    %v119 = vperm.slane %v118, 0
    %v136 = vunpack.c.l.b16 %v101
    %v137 = vunpack.c.l.b16 %v102
    %v138 = vunpack.c.l.b16 %v103
    %v139 = vunpack.c.l.b16 %v104
    %v140 = vunpack.c.l.b16 %v105
    %v141 = vunpack.c.l.b16 %v106
    %v142 = vunpack.c.l.b16 %v107
    %v143 = vunpack.c.l.b16 %v108
    %v144 = vunpack.c.l.b16 %v109
    %v145 = vunpack.c.l.b16 %v110
    %v146 = vunpack.c.l.b16 %v111
    %v147 = vunpack.c.l.b16 %v112
    %v148 = vunpack.c.l.b16 %v113
    %v149 = vunpack.c.l.b16 %v114
    %v150 = vunpack.c.l.b16 %v115
    %v151 = vunpack.c.l.b16 %v116
    %v152 = vpack.c.b16 %v137, %v136
    %v153 = vpack.c.b16 %v139, %v138
    %v154 = vpack.c.b16 %v141, %v140
    %v155 = vpack.c.b16 %v143, %v142
    %v156 = vpack.c.b16 %v145, %v144
    %v157 = vpack.c.b16 %v147, %v146
    %v158 = vpack.c.b16 %v149, %v148
    %v159 = vpack.c.b16 %v151, %v150
    %168 = vmatpush.bf16.msra.mxu0 %v159
    %169 = vmatpush.bf16.msra.mxu0 %v158
    %170 = vmatpush.bf16.msra.mxu0 %v157
    %171 = vmatpush.bf16.msra.mxu0 %v156
    %172 = vmatpush.bf16.msra.mxu0 %v155
    %173 = vmatpush.bf16.msra.mxu0 %v154
    %174 = vmatpush.bf16.msra.mxu0 %v153
    %175 = vmatpush.bf16.msra.mxu0 %v152
    %176 = vmatmul.bf16.gmra.mxu0 %v117
    %v177 = vpop.f32.mrf.mxu0
    %v178 = vadd.f32 %v119, %v177
    %v179 = vpop.f32.mrf.mxu0
    %180 = vdwg.mxu0
    %v181 = vld [vmem:[#allocation10 + $0x1] sm:$0x1]
    %v182 = vld [vmem:[#allocation10 + $0x2] sm:$0x1]
    %v183 = vrot.slane %v178, 4
    %v184 = vadd.f32 %v178, %v183
    %v185 = vrot.slane %v184, 2
    %v186 = vadd.f32 %v184, %v185
    %v187 = vrot.slane %v186, 1
    %v188 = vadd.f32 %v186, %v187
    %v189 = vrcp.pop 8.0
    %v190 = vmul.f32 8.0, %v189
    %v191 = vsub.f32 1.0, %v190
    %v192 = vmul.f32 %v189, %v191
    %v193 = vadd.f32 %v189, %v192
    %vm194 = vweird.f32 %v189
    %v195 = vsel %vm194, %v189, %v193
    %v196 = vmul.f32 %v188, %v195
    %v197 = vmul.f32 %v178, %v178
    %v198 = vrot.slane %v197, 4
    %v199 = vadd.f32 %v197, %v198
    %v200 = vrot.slane %v199, 2
    %v201 = vadd.f32 %v199, %v200
    %v202 = vrot.slane %v201, 1
    %v203 = vadd.f32 %v201, %v202
    %v204 = vmul.f32 %v203, %v195
    %v205 = vmul.f32 %v196, %v196
    %v206 = vsub.f32 %v204, %v205
    %v207 = vmax.f32 %v206, 0.0
    %v208 = vadd.f32 %v207, 1e-05
    %v209 = vrsqrt.pop %v208
    %v210 = vmul.f32 %v209, %v208
    %v211 = vmul.f32 %v210, %v209
    %v212 = vmul.f32 0.5, %v211
    %v213 = vsub.f32 1.5, %v212
    %v214 = vmul.f32 %v209, %v213
    %vm215 = vweird.f32 %v208
    %vm216 = vweird.f32 %v209
    %vm217 = vmor %vm215, %vm216
    %v218 = vsel %vm217, %v209, %v214
    %v219 = vmul.f32 %v181, %v218
    %v220 = vmul.f32 %v196, %v219
    %v221 = vsub.f32 %v182, %v220
    %v222 = vperm.slane %v219, 0
    %v223 = vmul.f32 %v178, %v222
    %v224 = vperm.slane %v221, 0
    %v225 = vadd.f32 %v223, %v224
    %vm226 = vcmp.gt.f32.partialorder %v225, 0.0
    %v227 = vmul.f32 %v225, 0.2
    %v228 = vsel %vm226, %v225, %v227
    %v229 = vld [vmem:[#allocation7 + $0x40] sm:$0xf]
    %v230 = vld [vmem:[#allocation7 + $0x44] sm:$0xf]
    %v231 = vld [vmem:[#allocation7 + $0x48] sm:$0xf]
    %v232 = vld [vmem:[#allocation7 + $0x4c] sm:$0xf]
    %v233 = vld [vmem:[#allocation7 + $0x50] sm:$0xf]
    %v234 = vld [vmem:[#allocation7 + $0x54] sm:$0xf]
    %v235 = vld [vmem:[#allocation7 + $0x58] sm:$0xf]
    %v236 = vld [vmem:[#allocation7 + $0x5c] sm:$0xf]
    %v237 = vld [vmem:[#allocation7 + $0x60] sm:$0xf]
    %v238 = vld [vmem:[#allocation7 + $0x64] sm:$0xf]
    %v239 = vld [vmem:[#allocation7 + $0x68] sm:$0xf]
    %v240 = vld [vmem:[#allocation7 + $0x6c] sm:$0xf]
    %v241 = vld [vmem:[#allocation7 + $0x70] sm:$0xf]
    %v242 = vld [vmem:[#allocation7 + $0x74] sm:$0xf]
    %v243 = vld [vmem:[#allocation7 + $0x78] sm:$0xf]
    %v244 = vld [vmem:[#allocation7 + $0x7c] sm:$0xf]
    %v245 = vpack.c.bf16 %v228, %v228
    %v246 = vld [vmem:[#allocation10 + $0x3] sm:$0x1]
    %v247 = vperm.slane %v246, 0
    %v264 = vunpack.c.l.b16 %v229
    %v265 = vunpack.c.l.b16 %v230
    %v266 = vunpack.c.l.b16 %v231
    %v267 = vunpack.c.l.b16 %v232
    %v268 = vunpack.c.l.b16 %v233
    %v269 = vunpack.c.l.b16 %v234
    %v270 = vunpack.c.l.b16 %v235
    %v271 = vunpack.c.l.b16 %v236
    %v272 = vunpack.c.l.b16 %v237
    %v273 = vunpack.c.l.b16 %v238
    %v274 = vunpack.c.l.b16 %v239
    %v275 = vunpack.c.l.b16 %v240
    %v276 = vunpack.c.l.b16 %v241
    %v277 = vunpack.c.l.b16 %v242
    %v278 = vunpack.c.l.b16 %v243
    %v279 = vunpack.c.l.b16 %v244
    %v280 = vpack.c.b16 %v265, %v264
    %v281 = vpack.c.b16 %v267, %v266
    %v282 = vpack.c.b16 %v269, %v268
    %v283 = vpack.c.b16 %v271, %v270
    %v284 = vpack.c.b16 %v273, %v272
    %v285 = vpack.c.b16 %v275, %v274
    %v286 = vpack.c.b16 %v277, %v276
    %v287 = vpack.c.b16 %v279, %v278
    %296 = vmatpush.bf16.msra.mxu0 %v287
    %297 = vmatpush.bf16.msra.mxu0 %v286
    %298 = vmatpush.bf16.msra.mxu0 %v285
    %299 = vmatpush.bf16.msra.mxu0 %v284
    %300 = vmatpush.bf16.msra.mxu0 %v283
    %301 = vmatpush.bf16.msra.mxu0 %v282
    %302 = vmatpush.bf16.msra.mxu0 %v281
    %303 = vmatpush.bf16.msra.mxu0 %v280
    %304 = vmatmul.bf16.gmra.mxu0 %v245
    %v305 = vpop.f32.mrf.mxu0
    %v306 = vadd.f32 %v247, %v305
    %v307 = vpop.f32.mrf.mxu0
    %308 = vdwg.mxu0
    %v309 = vld [vmem:[#allocation10 + $0x4] sm:$0x1]
    %v310 = vld [vmem:[#allocation10 + $0x5] sm:$0x1]
    %v311 = vrot.slane %v306, 4
    %v312 = vadd.f32 %v306, %v311
    %v313 = vrot.slane %v312, 2
    %v314 = vadd.f32 %v312, %v313
    %v315 = vrot.slane %v314, 1
    %v316 = vadd.f32 %v314, %v315
    %v317 = vmul.f32 %v316, %v195
    %v318 = vmul.f32 %v306, %v306
    %v319 = vrot.slane %v318, 4
    %v320 = vadd.f32 %v318, %v319
    %v321 = vrot.slane %v320, 2
    %v322 = vadd.f32 %v320, %v321
    %v323 = vrot.slane %v322, 1
    %v324 = vadd.f32 %v322, %v323
    %v325 = vmul.f32 %v324, %v195
    %v326 = vmul.f32 %v317, %v317
    %v327 = vsub.f32 %v325, %v326
    %v328 = vmax.f32 %v327, 0.0
    %v329 = vadd.f32 %v328, 1e-05
    %v330 = vrsqrt.pop %v329
    %v331 = vmul.f32 %v330, %v329
    %v332 = vmul.f32 %v331, %v330
    %v333 = vmul.f32 0.5, %v332
    %v334 = vsub.f32 1.5, %v333
    %v335 = vmul.f32 %v330, %v334
    %vm336 = vweird.f32 %v329
    %vm337 = vweird.f32 %v330
    %vm338 = vmor %vm336, %vm337
    %v339 = vsel %vm338, %v330, %v335
    %v340 = vmul.f32 %v309, %v339
    %v341 = vmul.f32 %v317, %v340
    %v342 = vsub.f32 %v310, %v341
    %v343 = vperm.slane %v340, 0
    %v344 = vmul.f32 %v306, %v343
    %v345 = vperm.slane %v342, 0
    %v346 = vadd.f32 %v344, %v345
    %vm347 = vcmp.gt.f32.partialorder %v346, 0.0
    %v348 = vmul.f32 %v346, 0.2
    %v349 = vsel %vm347, %v346, %v348
    %v350 = vld [vmem:[#allocation8] sm:$0xff]
    %v351 = vld [vmem:[#allocation8 + $0xc] sm:$0xff]
    %v352 = vld [vmem:[#allocation8 + $0x18] sm:$0xff]
    %v353 = vld [vmem:[#allocation8 + $0x24] sm:$0xff]
    %v354 = vld [vmem:[#allocation8 + $0x30] sm:$0xff]
    %v355 = vld [vmem:[#allocation8 + $0x3c] sm:$0xff]
    %v356 = vld [vmem:[#allocation8 + $0x48] sm:$0xff]
    %v357 = vld [vmem:[#allocation8 + $0x54] sm:$0xff]
    %v358 = vld [vmem:[#allocation8 + $0x60] sm:$0xff]
    %v359 = vld [vmem:[#allocation8 + $0x6c] sm:$0xff]
    %v360 = vld [vmem:[#allocation8 + $0x78] sm:$0xff]
    %v361 = vld [vmem:[#allocation8 + $0x84] sm:$0xff]
    %v362 = vld [vmem:[#allocation8 + $0x90] sm:$0xff]
    %v363 = vld [vmem:[#allocation8 + $0x9c] sm:$0xff]
    %v364 = vld [vmem:[#allocation8 + $0xa8] sm:$0xff]
    %v365 = vld [vmem:[#allocation8 + $0xb4] sm:$0xff]
    %v366 = vpack.c.bf16 %v349, %v349
    %v367 = vld [vmem:[%s5] sm:$0x3]
    %v369 = vperm.slane %v367, 0
    %v370 = vperm.slane %v367, 1
    %v389 = vunpack.c.l.b16 %v350
    %v390 = vunpack.c.h.b16 %v350
    %v391 = vunpack.c.l.b16 %v351
    %v392 = vunpack.c.h.b16 %v351
    %v393 = vunpack.c.l.b16 %v352
    %v394 = vunpack.c.h.b16 %v352
    %v395 = vunpack.c.l.b16 %v353
    %v396 = vunpack.c.h.b16 %v353
    %v397 = vunpack.c.l.b16 %v354
    %v398 = vunpack.c.h.b16 %v354
    %v399 = vunpack.c.l.b16 %v355
    %v400 = vunpack.c.h.b16 %v355
    %v401 = vunpack.c.l.b16 %v356
    %v402 = vunpack.c.h.b16 %v356
    %v403 = vunpack.c.l.b16 %v357
    %v404 = vunpack.c.h.b16 %v357
    %v405 = vunpack.c.l.b16 %v358
    %v406 = vunpack.c.h.b16 %v358
    %v407 = vunpack.c.l.b16 %v359
    %v408 = vunpack.c.h.b16 %v359
    %v409 = vunpack.c.l.b16 %v360
    %v410 = vunpack.c.h.b16 %v360
    %v411 = vunpack.c.l.b16 %v361
    %v412 = vunpack.c.h.b16 %v361
    %v413 = vunpack.c.l.b16 %v362
    %v414 = vunpack.c.h.b16 %v362
    %v415 = vunpack.c.l.b16 %v363
    %v416 = vunpack.c.h.b16 %v363
    %v417 = vunpack.c.l.b16 %v364
    %v418 = vunpack.c.h.b16 %v364
    %v419 = vunpack.c.l.b16 %v365
    %v420 = vunpack.c.h.b16 %v365
    %v421 = vpack.c.b16 %v391, %v389
    %v422 = vpack.c.b16 %v392, %v390
    %v423 = vpack.c.b16 %v395, %v393
    %v424 = vpack.c.b16 %v396, %v394
    %v425 = vpack.c.b16 %v399, %v397
    %v426 = vpack.c.b16 %v400, %v398
    %v427 = vpack.c.b16 %v403, %v401
    %v428 = vpack.c.b16 %v404, %v402
    %v429 = vpack.c.b16 %v407, %v405
    %v430 = vpack.c.b16 %v408, %v406
    %v431 = vpack.c.b16 %v411, %v409
    %v432 = vpack.c.b16 %v412, %v410
    %v433 = vpack.c.b16 %v415, %v413
    %v434 = vpack.c.b16 %v416, %v414
    %v435 = vpack.c.b16 %v419, %v417
    %v436 = vpack.c.b16 %v420, %v418
    %453 = vmatpush.bf16.msra.mxu0 %v435
    %454 = vmatpush.bf16.msra.mxu0 %v433
    %455 = vmatpush.bf16.msra.mxu0 %v431
    %456 = vmatpush.bf16.msra.mxu0 %v429
    %457 = vmatpush.bf16.msra.mxu0 %v427
    %458 = vmatpush.bf16.msra.mxu0 %v425
    %459 = vmatpush.bf16.msra.mxu0 %v423
    %460 = vmatpush.bf16.msra.mxu0 %v421
    %461 = vmatmul.bf16.gmra.mxu0 %v366
    %v462 = vpop.f32.mrf.mxu0
    %v463 = vadd.f32 %v369, %v462
    %v464 = vpop.f32.mrf.mxu0
    %465 = vdwg.mxu0
    %466 = vmatpush.bf16.msra.mxu0 %v436
    %467 = vmatpush.bf16.msra.mxu0 %v434
    %468 = vmatpush.bf16.msra.mxu0 %v432
    %469 = vmatpush.bf16.msra.mxu0 %v430
    %470 = vmatpush.bf16.msra.mxu0 %v428
    %471 = vmatpush.bf16.msra.mxu0 %v426
    %472 = vmatpush.bf16.msra.mxu0 %v424
    %473 = vmatpush.bf16.msra.mxu0 %v422
    %474 = vmatmul.bf16.gmra.mxu0 %v366
    %v475 = vpop.f32.mrf.mxu0
    %v476 = vadd.f32 %v370, %v475
    %v477 = vpop.f32.mrf.mxu0
    %478 = vdwg.mxu0
    %v479 = vld [vmem:[#allocation5] sm:$0xff]
    %v480 = vmul.f32 %v476, 1.442695
    %v481 = vpow.pop %v480
    %v482 = vmul.f32 %v479, %v481
    %v483 = vadd.f32 %v482, %v463
    %v484 = vld [vmem:[#allocation7 + $0x80] sm:$0xf]
    %v485 = vld [vmem:[#allocation7 + $0x84] sm:$0xf]
    %v486 = vld [vmem:[#allocation7 + $0x88] sm:$0xf]
    %v487 = vld [vmem:[#allocation7 + $0x8c] sm:$0xf]
    %v488 = vld [vmem:[#allocation7 + $0x90] sm:$0xf]
    %v489 = vld [vmem:[#allocation7 + $0x94] sm:$0xf]
    %v490 = vld [vmem:[#allocation7 + $0x98] sm:$0xf]
    %v491 = vld [vmem:[#allocation7 + $0x9c] sm:$0xf]
    %v492 = vld [vmem:[#allocation7 + $0xa0] sm:$0xf]
    %v493 = vld [vmem:[#allocation7 + $0xa4] sm:$0xf]
    %v494 = vld [vmem:[#allocation7 + $0xa8] sm:$0xf]
    %v495 = vld [vmem:[#allocation7 + $0xac] sm:$0xf]
    %v496 = vld [vmem:[#allocation7 + $0xb0] sm:$0xf]
    %v497 = vld [vmem:[#allocation7 + $0xb4] sm:$0xf]
    %v498 = vld [vmem:[#allocation7 + $0xb8] sm:$0xf]
    %v499 = vld [vmem:[#allocation7 + $0xbc] sm:$0xf]
    %v500 = vpack.c.bf16 %v483, %v483
    %v501 = vld [vmem:[#allocation10 + $0x6] sm:$0x1]
    %v502 = vperm.slane %v501, 0
    %v519 = vunpack.c.l.b16 %v484
    %v520 = vunpack.c.l.b16 %v485
    %v521 = vunpack.c.l.b16 %v486
    %v522 = vunpack.c.l.b16 %v487
    %v523 = vunpack.c.l.b16 %v488
    %v524 = vunpack.c.l.b16 %v489
    %v525 = vunpack.c.l.b16 %v490
    %v526 = vunpack.c.l.b16 %v491
    %v527 = vunpack.c.l.b16 %v492
    %v528 = vunpack.c.l.b16 %v493
    %v529 = vunpack.c.l.b16 %v494
    %v530 = vunpack.c.l.b16 %v495
    %v531 = vunpack.c.l.b16 %v496
    %v532 = vunpack.c.l.b16 %v497
    %v533 = vunpack.c.l.b16 %v498
    %v534 = vunpack.c.l.b16 %v499
    %v535 = vpack.c.b16 %v520, %v519
    %v536 = vpack.c.b16 %v522, %v521
    %v537 = vpack.c.b16 %v524, %v523
    %v538 = vpack.c.b16 %v526, %v525
    %v539 = vpack.c.b16 %v528, %v527
    %v540 = vpack.c.b16 %v530, %v529
    %v541 = vpack.c.b16 %v532, %v531
    %v542 = vpack.c.b16 %v534, %v533
    %551 = vmatpush.bf16.msra.mxu0 %v542
    %552 = vmatpush.bf16.msra.mxu0 %v541
    %553 = vmatpush.bf16.msra.mxu0 %v540
    %554 = vmatpush.bf16.msra.mxu0 %v539
    %555 = vmatpush.bf16.msra.mxu0 %v538
    %556 = vmatpush.bf16.msra.mxu0 %v537
    %557 = vmatpush.bf16.msra.mxu0 %v536
    %558 = vmatpush.bf16.msra.mxu0 %v535
    %559 = vmatmul.bf16.gmra.mxu0 %v500
    %v560 = vpop.f32.mrf.mxu0
    %v561 = vadd.f32 %v502, %v560
    %v562 = vpop.f32.mrf.mxu0
    %563 = vdwg.mxu0
    %vm564 = vcmp.gt.f32.partialorder %v561, 0.0
    %v565 = vmul.f32 %v561, 0.2
    %v566 = vsel %vm564, %v561, %v565
    %v567 = vld [vmem:[#allocation7 + $0xc0] sm:$0xf]
    %v568 = vld [vmem:[#allocation7 + $0xc4] sm:$0xf]
    %v569 = vld [vmem:[#allocation7 + $0xc8] sm:$0xf]
    %v570 = vld [vmem:[#allocation7 + $0xcc] sm:$0xf]
    %v571 = vld [vmem:[#allocation7 + $0xd0] sm:$0xf]
    %v572 = vld [vmem:[#allocation7 + $0xd4] sm:$0xf]
    %v573 = vld [vmem:[#allocation7 + $0xd8] sm:$0xf]
    %v574 = vld [vmem:[#allocation7 + $0xdc] sm:$0xf]
    %v575 = vld [vmem:[#allocation7 + $0xe0] sm:$0xf]
    %v576 = vld [vmem:[#allocation7 + $0xe4] sm:$0xf]
    %v577 = vld [vmem:[#allocation7 + $0xe8] sm:$0xf]
    %v578 = vld [vmem:[#allocation7 + $0xec] sm:$0xf]
    %v579 = vld [vmem:[#allocation7 + $0xf0] sm:$0xf]
    %v580 = vld [vmem:[#allocation7 + $0xf4] sm:$0xf]
    %v581 = vld [vmem:[#allocation7 + $0xf8] sm:$0xf]
    %v582 = vld [vmem:[#allocation7 + $0xfc] sm:$0xf]
    %v583 = vpack.c.bf16 %v566, %v566
    %v584 = vld [vmem:[#allocation10 + $0x7] sm:$0x1]
    %v585 = vperm.slane %v584, 0
    %v602 = vunpack.c.l.b16 %v567
    %v603 = vunpack.c.l.b16 %v568
    %v604 = vunpack.c.l.b16 %v569
    %v605 = vunpack.c.l.b16 %v570
    %v606 = vunpack.c.l.b16 %v571
    %v607 = vunpack.c.l.b16 %v572
    %v608 = vunpack.c.l.b16 %v573
    %v609 = vunpack.c.l.b16 %v574
    %v610 = vunpack.c.l.b16 %v575
    %v611 = vunpack.c.l.b16 %v576
    %v612 = vunpack.c.l.b16 %v577
    %v613 = vunpack.c.l.b16 %v578
    %v614 = vunpack.c.l.b16 %v579
    %v615 = vunpack.c.l.b16 %v580
    %v616 = vunpack.c.l.b16 %v581
    %v617 = vunpack.c.l.b16 %v582
    %v618 = vpack.c.b16 %v603, %v602
    %v619 = vpack.c.b16 %v605, %v604
    %v620 = vpack.c.b16 %v607, %v606
    %v621 = vpack.c.b16 %v609, %v608
    %v622 = vpack.c.b16 %v611, %v610
    %v623 = vpack.c.b16 %v613, %v612
    %v624 = vpack.c.b16 %v615, %v614
    %v625 = vpack.c.b16 %v617, %v616
    %634 = vmatpush.bf16.msra.mxu0 %v625
    %635 = vmatpush.bf16.msra.mxu0 %v624
    %636 = vmatpush.bf16.msra.mxu0 %v623
    %637 = vmatpush.bf16.msra.mxu0 %v622
    %638 = vmatpush.bf16.msra.mxu0 %v621
    %639 = vmatpush.bf16.msra.mxu0 %v620
    %640 = vmatpush.bf16.msra.mxu0 %v619
    %641 = vmatpush.bf16.msra.mxu0 %v618
    %642 = vmatmul.bf16.gmra.mxu0 %v583
    %v643 = vpop.f32.mrf.mxu0
    %v644 = vadd.f32 %v585, %v643
    %v645 = vpop.f32.mrf.mxu0
    %646 = vdwg.mxu0
    %vm647 = vcmp.gt.f32.partialorder %v644, 0.0
    %v648 = vmul.f32 %v644, 0.2
    %v649 = vsel %vm647, %v644, %v648
    %v650 = vld [vmem:[#allocation8 + $0x8] sm:$0xf]
    %v651 = vld [vmem:[#allocation8 + $0x14] sm:$0xf]
    %v652 = vld [vmem:[#allocation8 + $0x20] sm:$0xf]
    %v653 = vld [vmem:[#allocation8 + $0x2c] sm:$0xf]
    %v654 = vld [vmem:[#allocation8 + $0x38] sm:$0xf]
    %v655 = vld [vmem:[#allocation8 + $0x44] sm:$0xf]
    %v656 = vld [vmem:[#allocation8 + $0x50] sm:$0xf]
    %v657 = vld [vmem:[#allocation8 + $0x5c] sm:$0xf]
    %v658 = vld [vmem:[#allocation8 + $0x68] sm:$0xf]
    %v659 = vld [vmem:[#allocation8 + $0x74] sm:$0xf]
    %v660 = vld [vmem:[#allocation8 + $0x80] sm:$0xf]
    %v661 = vld [vmem:[#allocation8 + $0x8c] sm:$0xf]
    %v662 = vld [vmem:[#allocation8 + $0x98] sm:$0xf]
    %v663 = vld [vmem:[#allocation8 + $0xa4] sm:$0xf]
    %v664 = vld [vmem:[#allocation8 + $0xb0] sm:$0xf]
    %v665 = vld [vmem:[#allocation8 + $0xbc] sm:$0xf]
    %v666 = vpack.c.bf16 %v649, %v649
    %v667 = vld [vmem:[%s5 + $0x2] sm:$0x1]
    %v669 = vperm.slane %v667, 0
    %v687 = vunpack.c.l.b16 %v650
    %v688 = vunpack.c.l.b16 %v651
    %v689 = vunpack.c.l.b16 %v652
    %v690 = vunpack.c.l.b16 %v653
    %v691 = vunpack.c.l.b16 %v654
    %v692 = vunpack.c.l.b16 %v655
    %v693 = vunpack.c.l.b16 %v656
    %v694 = vunpack.c.l.b16 %v657
    %v695 = vunpack.c.l.b16 %v658
    %v696 = vunpack.c.l.b16 %v659
    %v697 = vunpack.c.l.b16 %v660
    %v698 = vunpack.c.l.b16 %v661
    %v699 = vunpack.c.l.b16 %v662
    %v700 = vunpack.c.l.b16 %v663
    %v701 = vunpack.c.l.b16 %v664
    %v702 = vunpack.c.l.b16 %v665
    %v703 = vpack.c.b16 %v688, %v687
    %v704 = vpack.c.b16 %v690, %v689
    %v705 = vpack.c.b16 %v692, %v691
    %v706 = vpack.c.b16 %v694, %v693
    %v707 = vpack.c.b16 %v696, %v695
    %v708 = vpack.c.b16 %v698, %v697
    %v709 = vpack.c.b16 %v700, %v699
    %v710 = vpack.c.b16 %v702, %v701
    %719 = vmatpush.bf16.msra.mxu0 %v710
    %720 = vmatpush.bf16.msra.mxu0 %v709
    %721 = vmatpush.bf16.msra.mxu0 %v708
    %722 = vmatpush.bf16.msra.mxu0 %v707
    %723 = vmatpush.bf16.msra.mxu0 %v706
    %724 = vmatpush.bf16.msra.mxu0 %v705
    %725 = vmatpush.bf16.msra.mxu0 %v704
    %726 = vmatpush.bf16.msra.mxu0 %v703
    %727 = vmatmul.bf16.gmra.mxu0 %v666
    %v728 = vpop.f32.mrf.mxu0
    %v729 = vadd.f32 %v669, %v728
    %v730 = vpop.f32.mrf.mxu0
    %731 = vdwg.mxu0
    %732 = vst [vmem:[#allocation11] sm:$0xff] %v729
    %733 = vst [vmem:[#allocation12] sm:$0xff] %v463
    %734 = vst [vmem:[#allocation14] sm:$0xff] %v476
    // Predicated region
    $region46: #{tpu_custom_call.1} parent=1 // pred_check
      _
    $region47: #{tpu_custom_call.1} parent=1 // pred_check_branch
      %736 = sbr.rel (0) target = $region49
    $region48: #{tpu_custom_call.1} parent=1 // pred_region
      %738 = vsyncadd [#allocation4], 0
      %s740 = sshll.u32 [#allocation11], 4
      %s741 = int_to_ptr.vmem [resolvable:$true] %s740
      %s742 = sshll.u32 %s6, 4
      %s743 = int_to_ptr.hbm [resolvable:$true] %s742
      %745 = dma.vmem_to_hbm [thread:$0]  %s741, 128, %s743, [#allocation4]
    $region49: #{tpu_custom_call.1} parent=1 // pred_fallthru
      _
    // Predicated region
    $region50: #{tpu_custom_call.1} parent=1 // pred_check
      _
    $region51: #{tpu_custom_call.1} parent=1 // pred_check_branch
      %747 = sbr.rel (0) target = $region53
    $region52: #{tpu_custom_call.1} parent=1 // pred_region
      %749 = vsyncadd [#allocation13], 0
      %s751 = sshll.u32 [#allocation12], 4
      %s752 = int_to_ptr.vmem [resolvable:$true] %s751
      %s753 = sshll.u32 %s7, 4
      %s754 = int_to_ptr.hbm [resolvable:$true] %s753
      %756 = dma.vmem_to_hbm [thread:$0]  %s752, 128, %s754, [#allocation13]
    $region53: #{tpu_custom_call.1} parent=1 // pred_fallthru
      _
    // Predicated region
    $region54: #{tpu_custom_call.1} parent=1 // pred_check
      _
    $region55: #{tpu_custom_call.1} parent=1 // pred_check_branch
      %758 = sbr.rel (0) target = $region57
    $region56: #{tpu_custom_call.1} parent=1 // pred_region
      %760 = vsyncadd [#allocation13], 0
      %s762 = sshll.u32 [#allocation14], 4
      %s763 = int_to_ptr.vmem [resolvable:$true] %s762
      %s764 = sshll.u32 %s8, 4
      %s765 = int_to_ptr.hbm [resolvable:$true] %s764
      %767 = dma.vmem_to_hbm [thread:$0]  %s763, 128, %s765, [#allocation13]
    $region57: #{tpu_custom_call.1} parent=1 // pred_fallthru
      _
    // Predicated region
    $region58: #{tpu_custom_call.1} parent=1 // pred_check
      _
    $region59: #{tpu_custom_call.1} parent=1 // pred_check_branch
      %769 = sbr.rel (0) target = $region61
    $region60: #{tpu_custom_call.1} parent=1 // pred_region
      %771 = dma.done [#allocation4], 128
    $region61: #{tpu_custom_call.1} parent=1 // pred_fallthru
      _
    // Predicated region
    $region62: #{tpu_custom_call.1} parent=1 // pred_check
      _
    $region63: #{tpu_custom_call.1} parent=1 // pred_check_branch
      %773 = sbr.rel (0) target = $region65
    $region64: #{tpu_custom_call.1} parent=1 // pred_region
      %775 = dma.done [#allocation13], 128
    $region65: #{tpu_custom_call.1} parent=1 // pred_fallthru
      _
    // Predicated region
    $region66: #{tpu_custom_call.1} parent=1 // pred_check
      _
    $region67: #{tpu_custom_call.1} parent=1 // pred_check_branch
      %777 = sbr.rel (0) target = $region69
    $region68: #{tpu_custom_call.1} parent=1 // pred_region
      %779 = dma.done [#allocation13], 128
    $region69: #{tpu_custom_call.1} parent=1 // pred_fallthru
      _
    %780 = vsyncpa [#allocation3], 1
    %781 = vsyncpa [#allocation6], 1
    %782 = vsyncpa [#allocation9], 1
    %783 = vsyncpa [#allocation4], 1
    %784 = vsyncpa [#allocation13], 1

</llo_original>
